<compile_context>
chip_gen: v5e
topology: v5e:2x2
jax: 0.10.0
libtpu: 0.0.40
codegen_flags: <defaults>
</compile_context>

<pallas_src>
import functools
from collections import namedtuple

import jax
import jax.numpy as jnp
from jax.experimental import pallas as pl
from jax.experimental.pallas import tpu as pltpu

Target = namedtuple("Target", ["name", "dim"])
PreparedParams = namedtuple("PreparedParams", ["w1", "w23", "w4", "vec", "readout_dim"])

BN_EPS = 1e-5


def _flat_kernel(x_ref, w1_ref, w23_ref, w4_ref, vec_ref, o_ref, *, mode):
    hidden = w1_ref.shape[1]
    out_pad = o_ref.shape[1]

    def bn_train(h, gamma, beta):
        # Training-mode BatchNorm1d (biased variance). Two-pass stats for
        # numerical stability, folded into a single per-channel scale/shift.
        mean = jnp.mean(h, axis=0, keepdims=True)
        centered = h - mean
        var = jnp.mean(centered * centered, axis=0, keepdims=True)
        scale = gamma * jax.lax.rsqrt(var + BN_EPS)
        return h * scale + (beta - mean * scale)

    def mm(a, w, b):
        # f32 in, f32 MXU accumulation, broadcast (1, C) bias add.
        return jnp.dot(a, w, preferred_element_type=jnp.float32) + b

    # Packed per-channel vectors: rows 0..8 = b1,g1,be1,b2,g2,be2,b3,g3,be3
    # (valid in lanes [:hidden]); row 9 = b4 (valid in lanes [:out_pad]).
    vec = vec_ref[...]
    b1, g1, be1 = vec[0:1, :hidden], vec[1:2, :hidden], vec[2:3, :hidden]
    b2, g2, be2 = vec[3:4, :hidden], vec[4:5, :hidden], vec[5:6, :hidden]
    b3, g3, be3 = vec[6:7, :hidden], vec[7:8, :hidden], vec[8:9, :hidden]
    b4 = vec[9:10, :out_pad]

    x = x_ref[...]
    h = bn_train(jnp.maximum(mm(x, w1_ref[...], b1), 0.0), g1, be1)
    h = bn_train(jnp.maximum(mm(h, w23_ref[0], b2), 0.0), g2, be2)
    h = bn_train(jnp.maximum(mm(h, w23_ref[1], b3), 0.0), g3, be3)

    out = mm(h, w4_ref[...], b4)          # lane-padded fc4 (unmasked store)
    if mode == "clf":
        out = jax.nn.sigmoid(out)
    o_ref[...] = out.astype(o_ref.dtype)


def prepare_flat_params(params):
    """One-time packing of the module parameters (hoisted out of the forward).

    Returns PreparedParams with:
      w1  : (state_dim, hidden)            f32
      w23 : (2, hidden, hidden)            f32 (fc2, fc3 stacked)
      w4  : (hidden, out_pad)              f32, fc4 zero-padded to 128-lane multiple
      vec : (10, max(hidden, out_pad))     f32, packed b/gamma/beta vectors
    """
    state_dim, hidden_dim = params["w1"].shape
    readout_dim = params["w4"].shape[1]
    out_pad = pl.cdiv(readout_dim, 128) * 128
    vec_w = max(hidden_dim, out_pad)

    w4_pad = jnp.zeros((hidden_dim, out_pad), jnp.float32)
    w4_pad = w4_pad.at[:, :readout_dim].set(params["w4"].astype(jnp.float32))

    vec = jnp.zeros((10, vec_w), jnp.float32)
    for i, k in enumerate(("b1", "g1", "be1", "b2", "g2", "be2", "b3", "g3", "be3")):
        vec = vec.at[i, :hidden_dim].set(jnp.reshape(params[k], (-1,)))
    vec = vec.at[9, :readout_dim].set(jnp.reshape(params["b4"], (-1,)))

    w23 = jnp.stack([params["w2"], params["w3"]], axis=0).astype(jnp.float32)

    return PreparedParams(
        w1=params["w1"].astype(jnp.float32),
        w23=w23,
        w4=w4_pad,
        vec=vec,
        readout_dim=int(readout_dim),
    )


def flat_forward(flat_graph_state, prepped, graph_targets, mode):
    """Runs the Flat MLP forward pass via a single Pallas kernel.

    flat_graph_state: (N, state_dim) float32
    prepped: PreparedParams from prepare_flat_params (one-time packing)
    Returns the same dict-of-targets structure as the PyTorch module.
    """
    n, state_dim = flat_graph_state.shape
    hidden_dim = prepped.w1.shape[1]
    out_pad = prepped.w4.shape[1]
    readout_dim = prepped.readout_dim

    operands = (flat_graph_state, prepped.w1, prepped.w23, prepped.w4, prepped.vec)

    def full_spec(a):
        # Whole array as one block (block_shape == array shape is always legal).
        return pl.BlockSpec(a.shape, lambda: (0,) * a.ndim)

    flops = 2 * n * (state_dim * hidden_dim
                     + 2 * hidden_dim * hidden_dim
                     + hidden_dim * out_pad)
    transcendentals = 3 * hidden_dim + (n * out_pad if mode == "clf" else 0)
    bytes_accessed = (sum(int(a.size) * a.dtype.itemsize for a in operands)
                      + n * out_pad * 4)

    out = pl.pallas_call(
        functools.partial(_flat_kernel, mode=mode),
        out_shape=jax.ShapeDtypeStruct((n, out_pad), jnp.float32),
        grid=(),
        in_specs=[full_spec(a) for a in operands],
        out_specs=pl.BlockSpec((n, out_pad), lambda: (0, 0)),
        # Actual footprint is ~150 KiB (operands + double buffers); 4 MiB
        # documents the tiny reservation instead of the 32 MiB default.
        compiler_params=pltpu.CompilerParams(vmem_limit_bytes=4 << 20),
        cost_estimate=pl.CostEstimate(flops=flops,
                                      transcendentals=transcendentals,
                                      bytes_accessed=bytes_accessed),
    )(*operands)

    out = out[:, :readout_dim]

    # Glue: build the target dict exactly like the PyTorch module.
    if mode == "clf":
        return {t.name: out for t in graph_targets}
    return {t.name: out[:, i] for i, t in enumerate(graph_targets)}


def init_params(key, state_dim, hidden_dim, readout_dim):
    """Init mimicking PyTorch Linear defaults; BN gamma/beta made non-trivial
    so the affine path is actually exercised. Weights stored as (in, out)."""
    dims = [(state_dim, hidden_dim),
            (hidden_dim, hidden_dim),
            (hidden_dim, hidden_dim),
            (hidden_dim, readout_dim)]
    params = {}
    keys = jax.random.split(key, 2 * len(dims) + 2 * 3)
    for i, (fan_in, fan_out) in enumerate(dims, start=1):
        bound = 1.0 / (fan_in ** 0.5)
        params[f"w{i}"] = jax.random.uniform(
            keys[2 * (i - 1)], (fan_in, fan_out), jnp.float32, -bound, bound)
        params[f"b{i}"] = jax.random.uniform(
            keys[2 * (i - 1) + 1], (1, fan_out), jnp.float32, -bound, bound)
    base = 2 * len(dims)
    for i, (_, fan_out) in enumerate(dims[:3], start=1):
        params[f"g{i}"] = jax.random.uniform(
            keys[base + 2 * (i - 1)], (1, fan_out), jnp.float32, 0.5, 1.5)
        params[f"be{i}"] = jax.random.uniform(
            keys[base + 2 * (i - 1) + 1], (1, fan_out), jnp.float32, -0.5, 0.5)
    return params


def _ref_forward(x, params):
    """Pure-JAX f32 reference mirroring the PyTorch module (training-mode BN,
    biased variance, eps=1e-5)."""
    def mm(a, w, b):
        return jnp.dot(a, w, preferred_element_type=jnp.float32) + b

    def bn(h, g, b):
        m = jnp.mean(h, axis=0, keepdims=True)
        v = jnp.mean((h - m) ** 2, axis=0, keepdims=True)
        return g * (h - m) / jnp.sqrt(v + BN_EPS) + b

    h = bn(jnp.maximum(mm(x, params["w1"], params["b1"]), 0.0),
           params["g1"], params["be1"])
    h = bn(jnp.maximum(mm(h, params["w2"], params["b2"]), 0.0),
           params["g2"], params["be2"])
    h = bn(jnp.maximum(mm(h, params["w3"], params["b3"]), 0.0),
           params["g3"], params["be3"])
    return mm(h, params["w4"], params["b4"])


if __name__ == "__main__":
    # Small config consistent with the module:
    #   state_dim=16, hidden_dim=32, two scalar graph targets -> readout_dim=2
    graph_targets = [Target("energy", 1), Target("stability", 1)]
    state_dim, hidden_dim = 16, 32
    readout_dim = sum(t.dim for t in graph_targets)

    key = jax.random.PRNGKey(0)
    k_x, k_p = jax.random.split(key)
    batch = 8
    flat_graph_state = jax.random.normal(k_x, (batch, state_dim), jnp.float32)
    params = init_params(k_p, state_dim, hidden_dim, readout_dim)

    # One-time parameter packing (hoisted out of the per-step forward).
    prepped = prepare_flat_params(params)

    expected = _ref_forward(flat_graph_state, params)

    # Tolerance covers possible differences in f32-matmul pass counts between
    # the Mosaic in-kernel dot and the XLA reference dot.
    ATOL = RTOL = 5e-3

    # --- mode != 'clf' (regression): per-target column slicing -------------
    out_reg = flat_forward(flat_graph_state, prepped, graph_targets, "reg")
    out_reg = jax.block_until_ready(out_reg)
    for i, t in enumerate(graph_targets):
        assert out_reg[t.name].shape == (batch,), t.name
        assert jnp.allclose(out_reg[t.name], expected[:, i],
                            atol=ATOL, rtol=RTOL), t.name

    # --- mode == 'clf': sigmoid, every target sees the full tensor ----------
    out_clf = flat_forward(flat_graph_state, prepped, graph_targets, "clf")
    out_clf = jax.block_until_ready(out_clf)
    expected_clf = jax.nn.sigmoid(expected)
    for t in graph_targets:
        assert out_clf[t.name].shape == (batch, readout_dim), t.name
        assert jnp.allclose(out_clf[t.name], expected_clf,
                            atol=ATOL, rtol=RTOL), t.name

    print("KERNEL_OK")
</pallas_src>

<mosaic_0001>
module attributes {stable_mosaic.version = 11 : i64} {
  func.func @_flat_kernel(%arg0: memref<8x16xf32, #tpu.memory_space<vmem>>, %arg1: memref<16x32xf32, #tpu.memory_space<vmem>>, %arg2: memref<2x32x32xf32, #tpu.memory_space<vmem>>, %arg3: memref<32x128xf32, #tpu.memory_space<vmem>>, %arg4: memref<10x128xf32, #tpu.memory_space<vmem>>, %arg5: memref<8x128xf32, #tpu.memory_space<vmem>>) attributes {dimension_semantics = [], scalar_prefetch = 0 : i64, scratch_operands = 0 : i64, tpu.core_type = #tpu.core_type<tc>} {
    %c0 = arith.constant 0 : index
    %c0_0 = arith.constant 0 : index
    %0 = vector.load %arg4[%c0, %c0_0] : memref<10x128xf32, #tpu.memory_space<vmem>>, vector<10x128xf32>
    %1 = vector.extract_strided_slice %0 {offsets = [0, 0], sizes = [1, 32], strides = [1, 1]} : vector<10x128xf32> to vector<1x32xf32>
    %2 = vector.extract_strided_slice %0 {offsets = [1, 0], sizes = [1, 32], strides = [1, 1]} : vector<10x128xf32> to vector<1x32xf32>
    %3 = vector.extract_strided_slice %0 {offsets = [2, 0], sizes = [1, 32], strides = [1, 1]} : vector<10x128xf32> to vector<1x32xf32>
    %4 = vector.extract_strided_slice %0 {offsets = [3, 0], sizes = [1, 32], strides = [1, 1]} : vector<10x128xf32> to vector<1x32xf32>
    %5 = vector.extract_strided_slice %0 {offsets = [4, 0], sizes = [1, 32], strides = [1, 1]} : vector<10x128xf32> to vector<1x32xf32>
    %6 = vector.extract_strided_slice %0 {offsets = [5, 0], sizes = [1, 32], strides = [1, 1]} : vector<10x128xf32> to vector<1x32xf32>
    %7 = vector.extract_strided_slice %0 {offsets = [6, 0], sizes = [1, 32], strides = [1, 1]} : vector<10x128xf32> to vector<1x32xf32>
    %8 = vector.extract_strided_slice %0 {offsets = [7, 0], sizes = [1, 32], strides = [1, 1]} : vector<10x128xf32> to vector<1x32xf32>
    %9 = vector.extract_strided_slice %0 {offsets = [8, 0], sizes = [1, 32], strides = [1, 1]} : vector<10x128xf32> to vector<1x32xf32>
    %10 = vector.extract_strided_slice %0 {offsets = [9, 0], sizes = [1, 128], strides = [1, 1]} : vector<10x128xf32> to vector<1x128xf32>
    %c0_1 = arith.constant 0 : index
    %c0_2 = arith.constant 0 : index
    %11 = vector.load %arg0[%c0_1, %c0_2] : memref<8x16xf32, #tpu.memory_space<vmem>>, vector<8x16xf32>
    %c0_3 = arith.constant 0 : index
    %c0_4 = arith.constant 0 : index
    %12 = vector.load %arg1[%c0_3, %c0_4] : memref<16x32xf32, #tpu.memory_space<vmem>>, vector<16x32xf32>
    %cst = arith.constant dense<0.000000e+00> : vector<8x32xf32>
    %13 = tpu.matmul %11, %12, %cst {dimension_numbers = #tpu.dot_dimension_numbers<[1], [0], [0], [1], [0, 0, 1, 1], [], []>} : vector<8x16xf32>, vector<16x32xf32>, vector<8x32xf32> -> vector<8x32xf32>
    %14 = vector.broadcast %1 : vector<1x32xf32> to vector<8x32xf32>
    %15 = arith.addf %13, %14 : vector<8x32xf32>
    %cst_5 = arith.constant 0.000000e+00 : f32
    %16 = vector.broadcast %cst_5 : f32 to vector<8x32xf32>
    %17 = arith.maximumf %15, %16 : vector<8x32xf32>
    %cst_6 = arith.constant dense<0.000000e+00> : vector<32xf32>
    %18 = vector.multi_reduction <add>, %17, %cst_6 [0] : vector<8x32xf32> to vector<32xf32>
    %19 = vector.shape_cast %18 : vector<32xf32> to vector<1x32xf32>
    %cst_7 = arith.constant 8.000000e+00 : f32
    %20 = vector.broadcast %cst_7 : f32 to vector<1x32xf32>
    %21 = arith.divf %19, %20 : vector<1x32xf32>
    %22 = vector.broadcast %21 : vector<1x32xf32> to vector<8x32xf32>
    %23 = arith.subf %17, %22 : vector<8x32xf32>
    %24 = arith.mulf %23, %23 : vector<8x32xf32>
    %cst_8 = arith.constant dense<0.000000e+00> : vector<32xf32>
    %25 = vector.multi_reduction <add>, %24, %cst_8 [0] : vector<8x32xf32> to vector<32xf32>
    %26 = vector.shape_cast %25 : vector<32xf32> to vector<1x32xf32>
    %cst_9 = arith.constant 8.000000e+00 : f32
    %27 = vector.broadcast %cst_9 : f32 to vector<1x32xf32>
    %28 = arith.divf %26, %27 : vector<1x32xf32>
    %cst_10 = arith.constant 9.99999974E-6 : f32
    %29 = vector.broadcast %cst_10 : f32 to vector<1x32xf32>
    %30 = arith.addf %28, %29 : vector<1x32xf32>
    %31 = math.rsqrt %30 : vector<1x32xf32>
    %32 = arith.mulf %2, %31 : vector<1x32xf32>
    %33 = vector.broadcast %32 : vector<1x32xf32> to vector<8x32xf32>
    %34 = arith.mulf %17, %33 : vector<8x32xf32>
    %35 = arith.mulf %21, %32 : vector<1x32xf32>
    %36 = arith.subf %3, %35 : vector<1x32xf32>
    %37 = vector.broadcast %36 : vector<1x32xf32> to vector<8x32xf32>
    %38 = arith.addf %34, %37 : vector<8x32xf32>
    %c0_11 = arith.constant 0 : index
    %c0_12 = arith.constant 0 : index
    %c0_13 = arith.constant 0 : index
    %39 = vector.load %arg2[%c0_11, %c0_12, %c0_13] : memref<2x32x32xf32, #tpu.memory_space<vmem>>, vector<1x32x32xf32>
    %40 = vector.shape_cast %39 : vector<1x32x32xf32> to vector<32x32xf32>
    %cst_14 = arith.constant dense<0.000000e+00> : vector<8x32xf32>
    %41 = tpu.matmul %38, %40, %cst_14 {dimension_numbers = #tpu.dot_dimension_numbers<[1], [0], [0], [1], [0, 0, 1, 1], [], []>} : vector<8x32xf32>, vector<32x32xf32>, vector<8x32xf32> -> vector<8x32xf32>
    %42 = vector.broadcast %4 : vector<1x32xf32> to vector<8x32xf32>
    %43 = arith.addf %41, %42 : vector<8x32xf32>
    %cst_15 = arith.constant 0.000000e+00 : f32
    %44 = vector.broadcast %cst_15 : f32 to vector<8x32xf32>
    %45 = arith.maximumf %43, %44 : vector<8x32xf32>
    %cst_16 = arith.constant dense<0.000000e+00> : vector<32xf32>
    %46 = vector.multi_reduction <add>, %45, %cst_16 [0] : vector<8x32xf32> to vector<32xf32>
    %47 = vector.shape_cast %46 : vector<32xf32> to vector<1x32xf32>
    %cst_17 = arith.constant 8.000000e+00 : f32
    %48 = vector.broadcast %cst_17 : f32 to vector<1x32xf32>
    %49 = arith.divf %47, %48 : vector<1x32xf32>
    %50 = vector.broadcast %49 : vector<1x32xf32> to vector<8x32xf32>
    %51 = arith.subf %45, %50 : vector<8x32xf32>
    %52 = arith.mulf %51, %51 : vector<8x32xf32>
    %cst_18 = arith.constant dense<0.000000e+00> : vector<32xf32>
    %53 = vector.multi_reduction <add>, %52, %cst_18 [0] : vector<8x32xf32> to vector<32xf32>
    %54 = vector.shape_cast %53 : vector<32xf32> to vector<1x32xf32>
    %cst_19 = arith.constant 8.000000e+00 : f32
    %55 = vector.broadcast %cst_19 : f32 to vector<1x32xf32>
    %56 = arith.divf %54, %55 : vector<1x32xf32>
    %cst_20 = arith.constant 9.99999974E-6 : f32
    %57 = vector.broadcast %cst_20 : f32 to vector<1x32xf32>
    %58 = arith.addf %56, %57 : vector<1x32xf32>
    %59 = math.rsqrt %58 : vector<1x32xf32>
    %60 = arith.mulf %5, %59 : vector<1x32xf32>
    %61 = vector.broadcast %60 : vector<1x32xf32> to vector<8x32xf32>
    %62 = arith.mulf %45, %61 : vector<8x32xf32>
    %63 = arith.mulf %49, %60 : vector<1x32xf32>
    %64 = arith.subf %6, %63 : vector<1x32xf32>
    %65 = vector.broadcast %64 : vector<1x32xf32> to vector<8x32xf32>
    %66 = arith.addf %62, %65 : vector<8x32xf32>
    %c1 = arith.constant 1 : index
    %c0_21 = arith.constant 0 : index
    %c0_22 = arith.constant 0 : index
    %67 = vector.load %arg2[%c1, %c0_21, %c0_22] : memref<2x32x32xf32, #tpu.memory_space<vmem>>, vector<1x32x32xf32>
    %68 = vector.shape_cast %67 : vector<1x32x32xf32> to vector<32x32xf32>
    %cst_23 = arith.constant dense<0.000000e+00> : vector<8x32xf32>
    %69 = tpu.matmul %66, %68, %cst_23 {dimension_numbers = #tpu.dot_dimension_numbers<[1], [0], [0], [1], [0, 0, 1, 1], [], []>} : vector<8x32xf32>, vector<32x32xf32>, vector<8x32xf32> -> vector<8x32xf32>
    %70 = vector.broadcast %7 : vector<1x32xf32> to vector<8x32xf32>
    %71 = arith.addf %69, %70 : vector<8x32xf32>
    %cst_24 = arith.constant 0.000000e+00 : f32
    %72 = vector.broadcast %cst_24 : f32 to vector<8x32xf32>
    %73 = arith.maximumf %71, %72 : vector<8x32xf32>
    %cst_25 = arith.constant dense<0.000000e+00> : vector<32xf32>
    %74 = vector.multi_reduction <add>, %73, %cst_25 [0] : vector<8x32xf32> to vector<32xf32>
    %75 = vector.shape_cast %74 : vector<32xf32> to vector<1x32xf32>
    %cst_26 = arith.constant 8.000000e+00 : f32
    %76 = vector.broadcast %cst_26 : f32 to vector<1x32xf32>
    %77 = arith.divf %75, %76 : vector<1x32xf32>
    %78 = vector.broadcast %77 : vector<1x32xf32> to vector<8x32xf32>
    %79 = arith.subf %73, %78 : vector<8x32xf32>
    %80 = arith.mulf %79, %79 : vector<8x32xf32>
    %cst_27 = arith.constant dense<0.000000e+00> : vector<32xf32>
    %81 = vector.multi_reduction <add>, %80, %cst_27 [0] : vector<8x32xf32> to vector<32xf32>
    %82 = vector.shape_cast %81 : vector<32xf32> to vector<1x32xf32>
    %cst_28 = arith.constant 8.000000e+00 : f32
    %83 = vector.broadcast %cst_28 : f32 to vector<1x32xf32>
    %84 = arith.divf %82, %83 : vector<1x32xf32>
    %cst_29 = arith.constant 9.99999974E-6 : f32
    %85 = vector.broadcast %cst_29 : f32 to vector<1x32xf32>
    %86 = arith.addf %84, %85 : vector<1x32xf32>
    %87 = math.rsqrt %86 : vector<1x32xf32>
    %88 = arith.mulf %8, %87 : vector<1x32xf32>
    %89 = vector.broadcast %88 : vector<1x32xf32> to vector<8x32xf32>
    %90 = arith.mulf %73, %89 : vector<8x32xf32>
    %91 = arith.mulf %77, %88 : vector<1x32xf32>
    %92 = arith.subf %9, %91 : vector<1x32xf32>
    %93 = vector.broadcast %92 : vector<1x32xf32> to vector<8x32xf32>
    %94 = arith.addf %90, %93 : vector<8x32xf32>
    %c0_30 = arith.constant 0 : index
    %c0_31 = arith.constant 0 : index
    %95 = vector.load %arg3[%c0_30, %c0_31] : memref<32x128xf32, #tpu.memory_space<vmem>>, vector<32x128xf32>
    %cst_32 = arith.constant dense<0.000000e+00> : vector<8x128xf32>
    %96 = tpu.matmul %94, %95, %cst_32 {dimension_numbers = #tpu.dot_dimension_numbers<[1], [0], [0], [1], [0, 0, 1, 1], [], []>} : vector<8x32xf32>, vector<32x128xf32>, vector<8x128xf32> -> vector<8x128xf32>
    %97 = vector.broadcast %10 : vector<1x128xf32> to vector<8x128xf32>
    %98 = arith.addf %96, %97 : vector<8x128xf32>
    %c0_33 = arith.constant 0 : index
    %c0_34 = arith.constant 0 : index
    %99 = vector.load %arg5[%c0_33, %c0_34] : memref<8x128xf32, #tpu.memory_space<vmem>>, vector<8x128xf32>
    tpu.vector_store %arg5[%c0_33, %c0_34], %98 {strides = array<i32>} : memref<8x128xf32, #tpu.memory_space<vmem>>, vector<8x128xf32>,
    return
  }
}

</mosaic_0001>

<llo_original>
// kernel: tpu_custom_call.1
$region0: #{tpu_custom_call.1}
  #allocation0 [shape = 'u32[]', space=smem, size = 0x4, offset = 0x4, fixed_abs, tag = 'smem constant byte address 0x4 - core index']
  #allocation1 [shape = 'u32[72,128]{1,0:T(1,128)}', space=vmem, size = 0x9000, scoped, tag = 'internal scratch']
  %s0 = inlined_call_operand.hbm [shape: f32[8,16], index: 0, kind: input, shape index: {}]
  %s1 = inlined_call_operand.hbm [shape: f32[16,32], index: 1, kind: input, shape index: {}]
  %s2 = inlined_call_operand.hbm [shape: f32[2,32,32], index: 2, kind: input, shape index: {}]
  %s3 = inlined_call_operand.hbm [shape: f32[32,128], index: 3, kind: input, shape index: {}]
  %s4 = inlined_call_operand.hbm [shape: f32[10,128], index: 4, kind: input, shape index: {}]
  %s5 = inlined_call_operand.hbm [shape: f32[8,128], index: 5, kind: output, shape index: {}]
  %s6 = sld [smem:[#allocation0]]
  $region50: #{tpu_custom_call.1} parent=0
    _
  %s8 = ssub.s32 1, %s6
  %s9 = scalar_select 0, %s8, %s6
  $region1: #{tpu_custom_call.1} parent=0
    #allocation2 [shape = 'u8[4096]{0}', space=vmem, size = 0x1000, scoped, tag = 'input window, operand 0, single buffered']
    #allocation3 [shape = 's32[1]{0}', space=sflag, size = 0x4, scoped, tag = 'scoped memory for tpu_custom_call.1']
    #allocation4 [shape = 's32[1]{0}', space=sflag, size = 0x4, scoped, tag = 'scoped memory for tpu_custom_call.1']
    #allocation5 [shape = 'u8[8192]{0}', space=vmem, size = 0x2000, scoped, tag = 'input window, operand 1, single buffered']
    #allocation6 [shape = 's32[1]{0}', space=sflag, size = 0x4, scoped, tag = 'scoped memory for tpu_custom_call.1']
    #allocation7 [shape = 'u8[32768]{0}', space=vmem, size = 0x8000, scoped, tag = 'input window, operand 2, single buffered']
    #allocation8 [shape = 'u8[16384]{0}', space=vmem, size = 0x4000, scoped, tag = 'input window, operand 3, single buffered']
    #allocation9 [shape = 's32[1]{0}', space=sflag, size = 0x4, scoped, tag = 'scoped memory for tpu_custom_call.1']
    #allocation10 [shape = 'u8[8192]{0}', space=vmem, size = 0x2000, scoped, tag = 'input window, operand 4, single buffered']
    #allocation11 [shape = 'u8[4096]{0}', space=vmem, size = 0x1000, scoped, tag = 'output window, operand 0, single buffered']
    %10 = vsyncpa [#allocation3], 0
    %11 = vsyncpa [#allocation6], 0
    %12 = vsyncpa [#allocation9], 0
    %13 = vsyncpa [#allocation4], 0
    // Predicated region
    $region2: #{tpu_custom_call.1} parent=1 // pred_check
      _
    $region3: #{tpu_custom_call.1} parent=1 // pred_check_branch
      %15 = sbr.rel (0) target = $region5
    $region4: #{tpu_custom_call.1} parent=1 // pred_region
      %17 = vsyncadd [#allocation3], 0
      %s19 = sshll.u32 %s0, 4
      %s20 = int_to_ptr.hbm [resolvable:$true] %s19
      %s21 = sshll.u32 [#allocation2], 4
      %s22 = int_to_ptr.vmem [resolvable:$true] %s21
      %24 = dma.hbm_to_vmem [thread:$0]  %s20, 128, %s22, [#allocation3]
    $region5: #{tpu_custom_call.1} parent=1 // pred_fallthru
      _
    // Predicated region
    $region6: #{tpu_custom_call.1} parent=1 // pred_check
      _
    $region7: #{tpu_custom_call.1} parent=1 // pred_check_branch
      %26 = sbr.rel (0) target = $region9
    $region8: #{tpu_custom_call.1} parent=1 // pred_region
      %28 = vsyncadd [#allocation6], 0
      %s29 = sshll.u32 %s1, 4
      %s30 = int_to_ptr.hbm [resolvable:$true] %s29
      %s31 = sshll.u32 [#allocation5], 4
      %s32 = int_to_ptr.vmem [resolvable:$true] %s31
      %37 = dma.hbm_to_vmem [thread:$0]  %s30, 256, %s32, [#allocation6], 128, 128, 8
    $region9: #{tpu_custom_call.1} parent=1 // pred_fallthru
      _
    // Predicated region
    $region10: #{tpu_custom_call.1} parent=1 // pred_check
      _
    $region11: #{tpu_custom_call.1} parent=1 // pred_check_branch
      %39 = sbr.rel (0) target = $region13
    $region12: #{tpu_custom_call.1} parent=1 // pred_region
      %41 = vsyncadd [#allocation6], 0
      %s42 = sshll.u32 %s2, 4
      %s43 = int_to_ptr.hbm [resolvable:$true] %s42
      %s44 = sshll.u32 [#allocation7], 4
      %s45 = int_to_ptr.vmem [resolvable:$true] %s44
      %50 = dma.hbm_to_vmem [thread:$0]  %s43, 1024, %s45, [#allocation6], 128, 128, 8
    $region13: #{tpu_custom_call.1} parent=1 // pred_fallthru
      _
    // Predicated region
    $region14: #{tpu_custom_call.1} parent=1 // pred_check
      _
    $region15: #{tpu_custom_call.1} parent=1 // pred_check_branch
      %52 = sbr.rel (0) target = $region17
    $region16: #{tpu_custom_call.1} parent=1 // pred_region
      %54 = vsyncadd [#allocation9], 0
      %s55 = sshll.u32 %s3, 4
      %s56 = int_to_ptr.hbm [resolvable:$true] %s55
      %s57 = sshll.u32 [#allocation8], 4
      %s58 = int_to_ptr.vmem [resolvable:$true] %s57
      %63 = dma.hbm_to_vmem [thread:$0]  %s56, 512, %s58, [#allocation9], 128, 128, 8
    $region17: #{tpu_custom_call.1} parent=1 // pred_fallthru
      _
    // Predicated region
    $region18: #{tpu_custom_call.1} parent=1 // pred_check
      _
    $region19: #{tpu_custom_call.1} parent=1 // pred_check_branch
      %65 = sbr.rel (0) target = $region21
    $region20: #{tpu_custom_call.1} parent=1 // pred_region
      %67 = vsyncadd [#allocation9], 0
      %s68 = sshll.u32 %s4, 4
      %s69 = int_to_ptr.hbm [resolvable:$true] %s68
      %s70 = sshll.u32 [#allocation10], 4
      %s71 = int_to_ptr.vmem [resolvable:$true] %s70
      %76 = dma.hbm_to_vmem [thread:$0]  %s69, 256, %s71, [#allocation9], 128, 128, 8
    $region21: #{tpu_custom_call.1} parent=1 // pred_fallthru
      _
    // Predicated region
    $region22: #{tpu_custom_call.1} parent=1 // pred_check
      _
    $region23: #{tpu_custom_call.1} parent=1 // pred_check_branch
      %78 = sbr.rel (0) target = $region25
    $region24: #{tpu_custom_call.1} parent=1 // pred_region
      %80 = dma.done [#allocation3], 128
    $region25: #{tpu_custom_call.1} parent=1 // pred_fallthru
      _
    // Predicated region
    $region26: #{tpu_custom_call.1} parent=1 // pred_check
      _
    $region27: #{tpu_custom_call.1} parent=1 // pred_check_branch
      %82 = sbr.rel (0) target = $region29
    $region28: #{tpu_custom_call.1} parent=1 // pred_region
      %84 = dma.done [#allocation6], 256
    $region29: #{tpu_custom_call.1} parent=1 // pred_fallthru
      _
    // Predicated region
    $region30: #{tpu_custom_call.1} parent=1 // pred_check
      _
    $region31: #{tpu_custom_call.1} parent=1 // pred_check_branch
      %86 = sbr.rel (0) target = $region33
    $region32: #{tpu_custom_call.1} parent=1 // pred_region
      %88 = dma.done [#allocation6], 1024
    $region33: #{tpu_custom_call.1} parent=1 // pred_fallthru
      _
    // Predicated region
    $region34: #{tpu_custom_call.1} parent=1 // pred_check
      _
    $region35: #{tpu_custom_call.1} parent=1 // pred_check_branch
      %90 = sbr.rel (0) target = $region37
    $region36: #{tpu_custom_call.1} parent=1 // pred_region
      %92 = dma.done [#allocation9], 512
    $region37: #{tpu_custom_call.1} parent=1 // pred_fallthru
      _
    // Predicated region
    $region38: #{tpu_custom_call.1} parent=1 // pred_check
      _
    $region39: #{tpu_custom_call.1} parent=1 // pred_check_branch
      %94 = sbr.rel (0) target = $region41
    $region40: #{tpu_custom_call.1} parent=1 // pred_region
      %96 = dma.done [#allocation9], 256
    $region41: #{tpu_custom_call.1} parent=1 // pred_fallthru
      _
    %v97 = vld [vmem:[#allocation10] sm:$0xff]
    %v98 = vld [vmem:[#allocation10 + $0x8] sm:$0x3]
    %v99 = vld [vmem:[#allocation2] sm:$0xff]
    %v100 = vld [vmem:[#allocation5] sm:$0xff]
    %v101 = vld [vmem:[#allocation5 + $0x8] sm:$0xff]
    %v102 = vperm.slane %v97, 0
    %vm103 = vcmask 130048
    %v105 = vsel %vm103, %v99, 0
    %107 = vmatpush.msra.mxu0 0.0
    %108 = vmatpush.msra.mxu0 0.0
    %109 = vmatpush.msra.mxu0 0.0
    %110 = vmatpush.msra.mxu0 0.0
    %111 = vmatpush.msra.mxu0 0.0
    %112 = vmatpush.msra.mxu0 0.0
    %113 = vmatpush.msra.mxu0 0.0
    %114 = vmatpush.msra.mxu0 0.0
    %115 = vmatpush.msra.mxu0 0.0
    %116 = vmatpush.msra.mxu0 0.0
    %117 = vmatpush.msra.mxu0 0.0
    %118 = vmatpush.msra.mxu0 0.0
    %119 = vmatpush.msra.mxu0 0.0
    %120 = vmatpush.msra.mxu0 0.0
    %121 = vmatpush.msra.mxu0 %v101
    %122 = vmatpush.msra.mxu0 %v100
    %123 = vmatmul.f32.gmra.mxu0 %v105
    %v124 = vpop.f32.mrf.mxu0
    %v125 = vadd.f32 %v102, %v124
    %126 = vdwg.mxu0
    %v127 = vmax.f32 %v125, 0.0
    %vm128 = vcmask 261120
    %v129 = vsel %vm128, %v127, 0.0
    %v130 = vrot.slane %v129, 4
    %v131 = vadd.f32 %v129, %v130
    %v132 = vrot.slane %v131, 2
    %v133 = vadd.f32 %v131, %v132
    %v134 = vrot.slane %v133, 1
    %v135 = vadd.f32 %v133, %v134
    %v136 = vrcp.pop 8.0
    %v137 = vmul.f32 8.0, %v136
    %v138 = vsub.f32 1.0, %v137
    %v139 = vmul.f32 %v136, %v138
    %v140 = vadd.f32 %v136, %v139
    %vm141 = vweird.f32 %v136
    %v142 = vsel %vm141, %v136, %v140
    %v143 = vmul.f32 %v135, %v142
    %v144 = vsub.f32 %v127, %v143
    %v145 = vmul.f32 %v144, %v144
    %v146 = vsel %vm128, %v145, 0.0
    %v147 = vrot.slane %v146, 4
    %v148 = vadd.f32 %v146, %v147
    %v149 = vrot.slane %v148, 2
    %v150 = vadd.f32 %v148, %v149
    %v151 = vrot.slane %v150, 1
    %v152 = vadd.f32 %v150, %v151
    %v153 = vmul.f32 %v152, %v142
    %v154 = vadd.f32 %v153, 1e-05
    %v155 = vrsqrt.pop %v154
    %v156 = vmul.f32 %v155, %v154
    %v157 = vmul.f32 %v156, %v155
    %v158 = vmul.f32 0.5, %v157
    %v159 = vsub.f32 1.5, %v158
    %v160 = vmul.f32 %v155, %v159
    %vm161 = vweird.f32 %v154
    %vm162 = vweird.f32 %v155
    %vm163 = vmor %vm161, %vm162
    %v164 = vsel %vm163, %v155, %v160
    %v165 = vmul.f32 %v97, %v164
    %v166 = vperm.slane %v165, 1
    %v167 = vmul.f32 %v127, %v166
    %v168 = vmul.f32 %v143, %v165
    %v170 = vrot.slane %v168, 7
    %v172 = vsub.f32 %v97, %v170
    %v173 = vperm.slane %v172, 2
    %v174 = vadd.f32 %v167, %v173
    %v175 = vld [vmem:[#allocation7] sm:$0xff]
    %v176 = vld [vmem:[#allocation7 + $0x8] sm:$0xff]
    %v177 = vld [vmem:[#allocation7 + $0x10] sm:$0xff]
    %v178 = vld [vmem:[#allocation7 + $0x18] sm:$0xff]
    %v179 = vperm.slane %v97, 3
    %v181 = vsel %vm128, %v174, 0
    %183 = vmatpush.msra.mxu0 0.0
    %184 = vmatpush.msra.mxu0 0.0
    %185 = vmatpush.msra.mxu0 0.0
    %186 = vmatpush.msra.mxu0 0.0
    %187 = vmatpush.msra.mxu0 0.0
    %188 = vmatpush.msra.mxu0 0.0
    %189 = vmatpush.msra.mxu0 0.0
    %190 = vmatpush.msra.mxu0 0.0
    %191 = vmatpush.msra.mxu0 0.0
    %192 = vmatpush.msra.mxu0 0.0
    %193 = vmatpush.msra.mxu0 0.0
    %194 = vmatpush.msra.mxu0 0.0
    %195 = vmatpush.msra.mxu0 %v178
    %196 = vmatpush.msra.mxu0 %v177
    %197 = vmatpush.msra.mxu0 %v176
    %198 = vmatpush.msra.mxu0 %v175
    %199 = vmatmul.f32.gmra.mxu0 %v181
    %v200 = vpop.f32.mrf.mxu0
    %v201 = vadd.f32 %v179, %v200
    %202 = vdwg.mxu0
    %v203 = vmax.f32 %v201, 0.0
    %v204 = vsel %vm128, %v203, 0.0
    %v205 = vrot.slane %v204, 4
    %v206 = vadd.f32 %v204, %v205
    %v207 = vrot.slane %v206, 2
    %v208 = vadd.f32 %v206, %v207
    %v209 = vrot.slane %v208, 1
    %v210 = vadd.f32 %v208, %v209
    %v211 = vmul.f32 %v210, %v142
    %v212 = vsub.f32 %v203, %v211
    %v213 = vmul.f32 %v212, %v212
    %v214 = vsel %vm128, %v213, 0.0
    %v215 = vrot.slane %v214, 4
    %v216 = vadd.f32 %v214, %v215
    %v217 = vrot.slane %v216, 2
    %v218 = vadd.f32 %v216, %v217
    %v219 = vrot.slane %v218, 1
    %v220 = vadd.f32 %v218, %v219
    %v221 = vmul.f32 %v220, %v142
    %v222 = vadd.f32 %v221, 1e-05
    %v223 = vrsqrt.pop %v222
    %v224 = vmul.f32 %v223, %v222
    %v225 = vmul.f32 %v224, %v223
    %v226 = vmul.f32 0.5, %v225
    %v227 = vsub.f32 1.5, %v226
    %v228 = vmul.f32 %v223, %v227
    %vm229 = vweird.f32 %v222
    %vm230 = vweird.f32 %v223
    %vm231 = vmor %vm229, %vm230
    %v232 = vsel %vm231, %v223, %v228
    %v233 = vmul.f32 %v97, %v232
    %v234 = vperm.slane %v233, 4
    %v235 = vmul.f32 %v203, %v234
    %v236 = vmul.f32 %v211, %v233
    %v238 = vrot.slane %v236, 7
    %v240 = vsub.f32 %v97, %v238
    %v241 = vperm.slane %v240, 5
    %v242 = vadd.f32 %v235, %v241
    %s243 = scalar_lea.vmem [#allocation7], 32
    %v244 = vld [vmem:[%s243] sm:$0xff]
    %v245 = vld [vmem:[%s243 + $0x8] sm:$0xff]
    %v246 = vld [vmem:[%s243 + $0x10] sm:$0xff]
    %v247 = vld [vmem:[%s243 + $0x18] sm:$0xff]
    %v248 = vperm.slane %v97, 6
    %v250 = vsel %vm128, %v242, 0
    %252 = vmatpush.msra.mxu0 0.0
    %253 = vmatpush.msra.mxu0 0.0
    %254 = vmatpush.msra.mxu0 0.0
    %255 = vmatpush.msra.mxu0 0.0
    %256 = vmatpush.msra.mxu0 0.0
    %257 = vmatpush.msra.mxu0 0.0
    %258 = vmatpush.msra.mxu0 0.0
    %259 = vmatpush.msra.mxu0 0.0
    %260 = vmatpush.msra.mxu0 0.0
    %261 = vmatpush.msra.mxu0 0.0
    %262 = vmatpush.msra.mxu0 0.0
    %263 = vmatpush.msra.mxu0 0.0
    %264 = vmatpush.msra.mxu0 %v247
    %265 = vmatpush.msra.mxu0 %v246
    %266 = vmatpush.msra.mxu0 %v245
    %267 = vmatpush.msra.mxu0 %v244
    %268 = vmatmul.f32.gmra.mxu0 %v250
    %v269 = vpop.f32.mrf.mxu0
    %v270 = vadd.f32 %v248, %v269
    %271 = vdwg.mxu0
    %v272 = vmax.f32 %v270, 0.0
    %v273 = vsel %vm128, %v272, 0.0
    %v274 = vrot.slane %v273, 4
    %v275 = vadd.f32 %v273, %v274
    %v276 = vrot.slane %v275, 2
    %v277 = vadd.f32 %v275, %v276
    %v278 = vrot.slane %v277, 1
    %v279 = vadd.f32 %v277, %v278
    %v280 = vmul.f32 %v279, %v142
    %v281 = vsub.f32 %v272, %v280
    %v282 = vmul.f32 %v281, %v281
    %v283 = vsel %vm128, %v282, 0.0
    %v284 = vrot.slane %v283, 4
    %v285 = vadd.f32 %v283, %v284
    %v286 = vrot.slane %v285, 2
    %v287 = vadd.f32 %v285, %v286
    %v288 = vrot.slane %v287, 1
    %v289 = vadd.f32 %v287, %v288
    %v290 = vmul.f32 %v289, %v142
    %v291 = vadd.f32 %v290, 1e-05
    %v292 = vrsqrt.pop %v291
    %v293 = vmul.f32 %v292, %v291
    %v294 = vmul.f32 %v293, %v292
    %v295 = vmul.f32 0.5, %v294
    %v296 = vsub.f32 1.5, %v295
    %v297 = vmul.f32 %v292, %v296
    %vm298 = vweird.f32 %v291
    %vm299 = vweird.f32 %v292
    %vm300 = vmor %vm298, %vm299
    %v301 = vsel %vm300, %v292, %v297
    %v302 = vmul.f32 %v97, %v301
    %v303 = vperm.slane %v302, 7
    %v304 = vmul.f32 %v272, %v303
    %v305 = vmul.f32 %v280, %v302
    %v307 = vrot.slane %v305, 7
    %v309 = vsub.f32 %v98, %v307
    %v310 = vperm.slane %v309, 0
    %v311 = vadd.f32 %v304, %v310
    %v312 = vld [vmem:[#allocation8] sm:$0xff]
    %v313 = vld [vmem:[#allocation8 + $0x8] sm:$0xff]
    %v314 = vld [vmem:[#allocation8 + $0x10] sm:$0xff]
    %v315 = vld [vmem:[#allocation8 + $0x18] sm:$0xff]
    %v316 = vperm.slane %v98, 1
    %v318 = vsel %vm128, %v311, 0
    %320 = vmatpush.msra.mxu0 0.0
    %321 = vmatpush.msra.mxu0 0.0
    %322 = vmatpush.msra.mxu0 0.0
    %323 = vmatpush.msra.mxu0 0.0
    %324 = vmatpush.msra.mxu0 0.0
    %325 = vmatpush.msra.mxu0 0.0
    %326 = vmatpush.msra.mxu0 0.0
    %327 = vmatpush.msra.mxu0 0.0
    %328 = vmatpush.msra.mxu0 0.0
    %329 = vmatpush.msra.mxu0 0.0
    %330 = vmatpush.msra.mxu0 0.0
    %331 = vmatpush.msra.mxu0 0.0
    %332 = vmatpush.msra.mxu0 %v315
    %333 = vmatpush.msra.mxu0 %v314
    %334 = vmatpush.msra.mxu0 %v313
    %335 = vmatpush.msra.mxu0 %v312
    %336 = vmatmul.f32.gmra.mxu0 %v318
    %v337 = vpop.f32.mrf.mxu0
    %v338 = vadd.f32 %v316, %v337
    %339 = vdwg.mxu0
    %340 = vst [vmem:[#allocation11] sm:$0xff] %v338
    // Predicated region
    $region42: #{tpu_custom_call.1} parent=1 // pred_check
      _
    $region43: #{tpu_custom_call.1} parent=1 // pred_check_branch
      %342 = sbr.rel (0) target = $region45
    $region44: #{tpu_custom_call.1} parent=1 // pred_region
      %344 = vsyncadd [#allocation4], 0
      %s346 = sshll.u32 [#allocation11], 4
      %s347 = int_to_ptr.vmem [resolvable:$true] %s346
      %s348 = sshll.u32 %s5, 4
      %s349 = int_to_ptr.hbm [resolvable:$true] %s348
      %351 = dma.vmem_to_hbm [thread:$0]  %s347, 128, %s349, [#allocation4]
    $region45: #{tpu_custom_call.1} parent=1 // pred_fallthru
      _
    // Predicated region
    $region46: #{tpu_custom_call.1} parent=1 // pred_check
      _
    $region47: #{tpu_custom_call.1} parent=1 // pred_check_branch
      %353 = sbr.rel (0) target = $region49
    $region48: #{tpu_custom_call.1} parent=1 // pred_region
      %355 = dma.done [#allocation4], 128
    $region49: #{tpu_custom_call.1} parent=1 // pred_fallthru
      _
    %356 = vsyncpa [#allocation3], 1
    %357 = vsyncpa [#allocation6], 1
    %358 = vsyncpa [#allocation9], 1
    %359 = vsyncpa [#allocation4], 1

</llo_original>
